<compile_context>
chip_gen: v7x
topology: tpu7x:2x2x1
jax: 0.10.0
libtpu: 0.0.40
codegen_flags: <defaults>
</compile_context>

<pallas_src>
import math

import jax
import jax.numpy as jnp
from jax.experimental import pallas as pl
from jax.experimental.pallas import tpu as pltpu


def _layer_scale_kernel(x_ref, gamma_ref, o_ref):
    # Single VPU multiply per vreg; the cast is a no-op when dtypes already match.
    o_ref[...] = x_ref[...].astype(o_ref.dtype) * gamma_ref[...]


def _round_up(a: int, b: int) -> int:
    return -(-a // b) * b


def _target_block_bytes() -> int:
    """Generation-aware block-size target.

    v7x  (64 MiB VMEM, ~3.2 TB/s HBM): 8 MiB blocks amortize the fixed per-grid-step
         overhead; live set (2 in + 2 out buffers) stays ~33 MiB.
    v5e/v6e (128 MiB VMEM): 2 MiB blocks already hit ~85% of HBM roofline.
    """
    try:
        info = pltpu.get_tpu_info()
        vmem = int(getattr(info, "vmem_capacity_bytes", 128 * 1024 * 1024))
    except Exception:
        vmem = 128 * 1024 * 1024
    if vmem <= 64 * 1024 * 1024:
        return 8 * 1024 * 1024
    return 2 * 1024 * 1024


def layer_scale(x: jax.Array, gamma: jax.Array) -> jax.Array:
    """Applies y = x * gamma where gamma (dim,) broadcasts along the last dim of x."""
    orig_shape = x.shape
    dim = orig_shape[-1]
    assert gamma.shape == (dim,)

    # Match out-of-place `x * gamma` promotion semantics.
    out_dtype = jnp.result_type(x.dtype, gamma.dtype)
    gamma = gamma.astype(out_dtype)

    # Flatten all leading dims into rows -> (rows, dim).
    x2d = x.reshape(-1, dim)
    rows = x2d.shape[0]
    if rows == 0:  # degenerate empty input
        return (x.astype(out_dtype) * gamma).reshape(orig_shape)

    # Lane-dense repack (always): fold k consecutive rows into one row of width k*dim so
    # the block width is a multiple of 128 lanes (unmasked full-width stores).
    k = 128 // math.gcd(dim, 128)
    width = k * dim                       # always a multiple of 128
    padded_rows = _round_up(rows, k)      # pad < 128 rows; sliced off afterwards
    if padded_rows != rows:
        x2d = jnp.pad(x2d, ((0, padded_rows - rows), (0, 0)))
    packed_rows = padded_rows // k
    x_packed = x2d.reshape(packed_rows, width)
    gamma_row = (jnp.tile(gamma, k) if k > 1 else gamma).reshape(1, width)

    in_bytes = jnp.dtype(x.dtype).itemsize
    out_bytes = jnp.dtype(out_dtype).itemsize
    sub = max(8, 32 // min(in_bytes, out_bytes))   # sublane pack unit (8 f32, 16 bf16)
    target = _target_block_bytes()

    # Column tiling only when one sub-row strip of the full width would already exceed
    # the block budget (very large dim, or odd dim where k=128 inflates width).
    tile_cols = width
    if width * sub * out_bytes > target:
        m = width // 128
        max_d = max(1, target // (128 * sub * out_bytes))
        best_d = 1
        for d in range(1, m + 1):
            if m % d == 0 and d <= max_d:
                best_d = d
        tile_cols = 128 * best_d

    # Row tiling: biggest multiple of the sublane unit within the budget, preferring a
    # tile that divides packed_rows evenly so there is no masked tail iteration.
    budget_rows = max(sub, (target // (tile_cols * out_bytes)) // sub * sub)
    if packed_rows <= budget_rows:
        tile_rows = packed_rows           # single full-extent block (always legal)
    else:
        tile_rows = budget_rows
        t = budget_rows
        while t >= max(sub, budget_rows // 2):
            if packed_rows % t == 0:
                tile_rows = t
                break
            t -= sub

    grid = (pl.cdiv(packed_rows, tile_rows), width // tile_cols)

    # Raise the scoped-VMEM limit just enough for the double-buffered live set
    # (2x input + 2x output blocks + gamma tile), capped well under v7x's 64 MiB.
    block_elems = tile_rows * tile_cols
    live_bytes = 2 * block_elems * (in_bytes + out_bytes) + 2 * tile_cols * out_bytes
    vmem_limit = int(min(max(live_bytes + (4 << 20), 32 << 20), 48 << 20))

    out = pl.pallas_call(
        _layer_scale_kernel,
        out_shape=jax.ShapeDtypeStruct((packed_rows, width), out_dtype),
        grid=grid,
        in_specs=[
            pl.BlockSpec((tile_rows, tile_cols), lambda i, j: (i, j)),
            pl.BlockSpec((1, tile_cols), lambda i, j: (0, j)),   # gamma tile, VMEM-resident
        ],
        out_specs=pl.BlockSpec((tile_rows, tile_cols), lambda i, j: (i, j)),
        compiler_params=pltpu.CompilerParams(
            # Both axes fully independent -> megacore sharding on v7x; neutral elsewhere.
            dimension_semantics=("parallel", "parallel"),
            vmem_limit_bytes=vmem_limit,
        ),
    )(x_packed, gamma_row)

    out2d = out.reshape(padded_rows, dim)
    if padded_rows != rows:
        out2d = out2d[:rows]
    return out2d.reshape(orig_shape)


if __name__ == "__main__":
    key = jax.random.PRNGKey(0)
    init_values = 1e-05

    # Case 1: module default usage — dim=32, input (batch=2, seq=8, dim=32), f32.
    dim = 32
    gamma = init_values * jnp.ones((dim,), dtype=jnp.float32)
    x = jax.random.normal(key, (2, 8, dim), dtype=jnp.float32)
    y = layer_scale(x, gamma)
    jax.block_until_ready(y)
    assert y.shape == x.shape and y.dtype == x.dtype
    assert jnp.allclose(y, x * gamma, atol=1e-6, rtol=1e-6)

    # Case 2: dim already a multiple of 128 (no repack), odd row count.
    dim2 = 256
    gamma2 = init_values * jnp.ones((dim2,), dtype=jnp.float32)
    x2 = jax.random.normal(jax.random.PRNGKey(1), (3, 5, dim2), dtype=jnp.float32)
    y2 = layer_scale(x2, gamma2)
    jax.block_until_ready(y2)
    assert jnp.allclose(y2, x2 * gamma2, atol=1e-6, rtol=1e-6)

    # Case 3: repack + row padding (rows=21 not a multiple of k=8), bf16 x with f32 gamma
    # — output promotes to f32, matching the out-of-place `x * gamma` semantics.
    dim3 = 48
    gamma3 = init_values * jnp.ones((dim3,), dtype=jnp.float32)
    x3 = jax.random.normal(jax.random.PRNGKey(2), (3, 7, dim3), dtype=jnp.bfloat16)
    y3 = layer_scale(x3, gamma3)
    jax.block_until_ready(y3)
    ref3 = x3 * gamma3
    assert y3.shape == x3.shape and y3.dtype == ref3.dtype
    assert jnp.allclose(y3, ref3, atol=1e-3, rtol=1e-3)

    # TODO(synk): inplace=True (x.mul_) has no functional-JAX equivalent; the out-of-place
    # result is numerically identical. Donating x via input_output_aliases would mirror the
    # in-place HBM footprint but risks clobbering a caller-held buffer, so it is omitted.
    print("KERNEL_OK")
</pallas_src>

<mosaic_0001>
module attributes {stable_mosaic.version = 11 : i64} {
  func.func @_layer_scale_kernel(%arg0: i32, %arg1: i32, %arg2: memref<4x128xf32, #tpu.memory_space<vmem>>, %arg3: memref<1x128xf32, #tpu.memory_space<vmem>>, %arg4: memref<4x128xf32, #tpu.memory_space<vmem>>) attributes {dimension_semantics = [#tpu.dimension_semantics<parallel>, #tpu.dimension_semantics<parallel>], iteration_bounds = array<i64: 1, 1>, scalar_prefetch = 0 : i64, scratch_operands = 0 : i64, tpu.core_type = #tpu.core_type<tc>, window_params = [{transform_indices = @transform_0, window_bounds = array<i64: 4, 128>}, {transform_indices = @transform_1, window_bounds = array<i64: 1, 128>}, {transform_indices = @transform_2, window_bounds = array<i64: 4, 128>}]} {
    %c0 = arith.constant 0 : index
    %c0_0 = arith.constant 0 : index
    %0 = vector.load %arg2[%c0, %c0_0] : memref<4x128xf32, #tpu.memory_space<vmem>>, vector<4x128xf32>
    %c0_1 = arith.constant 0 : index
    %c0_2 = arith.constant 0 : index
    %1 = vector.load %arg3[%c0_1, %c0_2] : memref<1x128xf32, #tpu.memory_space<vmem>>, vector<1x128xf32>
    %2 = vector.broadcast %1 : vector<1x128xf32> to vector<4x128xf32>
    %3 = arith.mulf %0, %2 : vector<4x128xf32>
    %c0_3 = arith.constant 0 : index
    %c0_4 = arith.constant 0 : index
    %4 = vector.load %arg4[%c0_3, %c0_4] : memref<4x128xf32, #tpu.memory_space<vmem>>, vector<4x128xf32>
    tpu.vector_store %arg4[%c0_3, %c0_4], %3 {strides = array<i32>} : memref<4x128xf32, #tpu.memory_space<vmem>>, vector<4x128xf32>,
    return
  }
  func.func @transform_0(%arg0: i32, %arg1: i32) -> (i32, i32) {
    %c0_i32 = arith.constant 0 : i32
    return %arg0, %arg1 : i32, i32
  }
  func.func @transform_1(%arg0: i32, %arg1: i32) -> (i32, i32) {
    %c0_i32 = arith.constant 0 : i32
    %c0_i32_0 = arith.constant 0 : i32
    return %c0_i32, %arg1 : i32, i32
  }
  func.func @transform_2(%arg0: i32, %arg1: i32) -> (i32, i32) {
    %c0_i32 = arith.constant 0 : i32
    return %arg0, %arg1 : i32, i32
  }
}

</mosaic_0001>

<llo_original>
// kernel: tpu_custom_call.1
$region0: #{tpu_custom_call.1}
  #allocation0 [shape = 'u32[]', space=smem, size = 0x4, offset = 0x4, fixed_abs, tag = 'smem constant byte address 0x4 - core index']
  #allocation1 [shape = 'u32[144,128]{1,0:T(1,128)}', space=vmem, size = 0x12000, scoped, tag = 'internal scratch']
  %s0 = inlined_call_operand.hbm [shape: f32[4,128], index: 0, kind: input, shape index: {}]
  %s1 = inlined_call_operand.vmem [shape: f32[1,128], index: 1, kind: input, shape index: {}]
  %s2 = inlined_call_operand.hbm [shape: f32[4,128], index: 2, kind: output, shape index: {}]
  %s3 = sld [smem:[#allocation0]]
  $region22: #{tpu_custom_call.1} parent=0
    _
  %s5 = ssub.s32 1, %s3
  %s6 = scalar_select 0, %s5, %s3
  $region1: #{tpu_custom_call.1} parent=0
    #allocation2 [shape = 'u8[2048]{0}', space=vmem, size = 0x800, scoped, tag = 'input window, operand 0, single buffered']
    #allocation3 [shape = 's32[1]{0}', space=sflag, size = 0x4, scoped, tag = 'scoped memory for tpu_custom_call.1']
    #allocation4 [shape = 's32[1]{0}', space=sflag, size = 0x4, scoped, tag = 'scoped memory for tpu_custom_call.1']
    #allocation5 [shape = 'u8[2048]{0}', space=vmem, size = 0x800, scoped, tag = 'output window, operand 0, single buffered']
    %7 = vsyncpa [#allocation3], 0
    %8 = vsyncpa [#allocation4], 0
    // Predicated region
    $region2: #{tpu_custom_call.1} parent=1 // pred_check
      _
    $region3: #{tpu_custom_call.1} parent=1 // pred_check_branch
      %10 = sbr.rel (0) target = $region5
    $region4: #{tpu_custom_call.1} parent=1 // pred_region
      %s12 = ssub.s32 64, 64
      %13 = vsyncadd [#allocation3], %s12
      %s15 = sshll.u32 [#allocation2], 4
      %s16 = int_to_ptr.vmem [resolvable:$true] %s15
      %18 = dma.hbm_to_vmem [thread:$0]  %s0, 64, %s16, [#allocation3]
    $region5: #{tpu_custom_call.1} parent=1 // pred_fallthru
      _
    // Predicated region
    $region6: #{tpu_custom_call.1} parent=1 // pred_check
      _
    $region7: #{tpu_custom_call.1} parent=1 // pred_check_branch
      %20 = sbr.rel (0) target = $region9
    $region8: #{tpu_custom_call.1} parent=1 // pred_region
      _
    $region9: #{tpu_custom_call.1} parent=1 // pred_fallthru
      _
    // Predicated region
    $region10: #{tpu_custom_call.1} parent=1 // pred_check
      _
    $region11: #{tpu_custom_call.1} parent=1 // pred_check_branch
      %22 = sbr.rel (0) target = $region13
    $region12: #{tpu_custom_call.1} parent=1 // pred_region
      %23 = dma.done [#allocation3], 64
    $region13: #{tpu_custom_call.1} parent=1 // pred_fallthru
      _
    %v24 = vld [vmem:[#allocation2] sm:$0xf]
    %v25 = vld [vmem:[%s1] sm:$0x1]
    %v27 = vlaneseq
    %v28 = vshrl.u32 %v27, 7
    %v29 = vsub.s32 0, %v28
    %v30 = vrot.slane %v25, %v29
    %v32 = vmul.f32 %v24, %v30
    %33 = vst [vmem:[#allocation5] sm:$0xf] %v32
    // Predicated region
    $region14: #{tpu_custom_call.1} parent=1 // pred_check
      _
    $region15: #{tpu_custom_call.1} parent=1 // pred_check_branch
      %35 = sbr.rel (0) target = $region17
    $region16: #{tpu_custom_call.1} parent=1 // pred_region
      %s37 = ssub.s32 64, 64
      %38 = vsyncadd [#allocation4], %s37
      %s40 = sshll.u32 [#allocation5], 4
      %s41 = int_to_ptr.vmem [resolvable:$true] %s40
      %43 = dma.vmem_to_hbm [thread:$0]  %s41, 64, %s2, [#allocation4]
    $region17: #{tpu_custom_call.1} parent=1 // pred_fallthru
      _
    // Predicated region
    $region18: #{tpu_custom_call.1} parent=1 // pred_check
      _
    $region19: #{tpu_custom_call.1} parent=1 // pred_check_branch
      %45 = sbr.rel (0) target = $region21
    $region20: #{tpu_custom_call.1} parent=1 // pred_region
      %46 = dma.done [#allocation4], 64
    $region21: #{tpu_custom_call.1} parent=1 // pred_fallthru
      _
    %47 = vsyncpa [#allocation3], 1
    %48 = vsyncpa [#allocation4], 1

</llo_original>
